<compile_context>
chip_gen: v7x
topology: tpu7x:2x2x1
jax: 0.10.0
libtpu: 0.0.40
codegen_flags: <defaults>
</compile_context>

<pallas_src>
import functools

import jax
import jax.numpy as jnp
from jax.experimental import pallas as pl
from jax.experimental.pallas import tpu as pltpu


# ----------------------------- Pallas kernel --------------------------------

def _mlp_head_kernel(x_ref, w1_ref, b1_ref, w2_ref, b2_ref, w3_ref, b3_ref, o_ref):
    # x: (tm, Hp) compute dtype; weights (in, out) compute dtype; biases (1, N) f32;
    # output (tm, Op) f32.  All dims are (8/16, 128)-aligned, so every matmul is a
    # full MXU pass and every store is unmasked.
    compute_dtype = w1_ref.dtype

    h1 = jnp.dot(x_ref[...], w1_ref[...], preferred_element_type=jnp.float32) + b1_ref[...]
    h1 = jnp.maximum(h1, 0.0).astype(compute_dtype)          # ReLU in f32 (VPU), cast for MXU

    h2 = jnp.dot(h1, w2_ref[...], preferred_element_type=jnp.float32) + b2_ref[...]
    h2 = jnp.maximum(h2, 0.0).astype(compute_dtype)          # ReLU

    o_ref[...] = jnp.dot(h2, w3_ref[...], preferred_element_type=jnp.float32) + b3_ref[...]


# ------------------------------- Wrapper -------------------------------------

def _round_up(x, m):
    return ((x + m - 1) // m) * m


def _pad_2d(x, rows, cols):
    r, c = x.shape
    if r == rows and c == cols:
        return x
    return jnp.pad(x, ((0, rows - r), (0, cols - c)))


def mlp_head(cls_embedding, w1, b1, w2, b2, w3, b3, *,
             block_b=256, compute_dtype=jnp.float32):
    """3-layer MLP head.  Batch-tiled grid, VMEM-resident weights, lane-dense shapes."""
    B, H = cls_embedding.shape
    mid = w1.shape[1]
    out_dim = w3.shape[1]

    # Sublane tile: f32 -> 8 rows, bf16 -> 16 rows.
    sub = 16 if compute_dtype == jnp.bfloat16 else 8

    # Lane-dense (multiple-of-128) feature dims; 218 -> 256, H -> 128.
    Hp = _round_up(H, 128)
    Mp = _round_up(mid, 128)
    Op = _round_up(out_dim, 128)

    # Batch tile: at most block_b rows per grid step, at least one sublane tile.
    tm = _round_up(min(block_b, max(B, sub)), sub)
    Bp = _round_up(B, tm)

    # Zero-pad so padded rows/cols contribute nothing to the valid output slice.
    x_p = _pad_2d(cls_embedding.astype(compute_dtype), Bp, Hp)
    w1_p = _pad_2d(w1, Hp, Mp).astype(compute_dtype)
    w2_p = _pad_2d(w2, Mp, Mp).astype(compute_dtype)
    w3_p = _pad_2d(w3, Mp, Op).astype(compute_dtype)
    # Biases stay f32: post-matmul bias add / ReLU run in f32 on the VPU.
    b1_p = _pad_2d(b1.reshape(1, -1).astype(jnp.float32), 1, Mp)
    b2_p = _pad_2d(b2.reshape(1, -1).astype(jnp.float32), 1, Mp)
    b3_p = _pad_2d(b3.reshape(1, -1).astype(jnp.float32), 1, Op)

    # Weights/biases: constant index_map -> stay VMEM-resident across batch steps.
    resident = lambda shape: pl.BlockSpec(shape, lambda i: (0, 0))

    itemsize = jnp.dtype(compute_dtype).itemsize
    flops = 2 * Bp * (Hp * Mp + Mp * Mp + Mp * Op)
    bytes_accessed = (Bp * Hp * itemsize                      # x in
                      + (Hp * Mp + Mp * Mp + Mp * Op) * itemsize  # weights
                      + (2 * Mp + Op) * 4                     # biases (f32)
                      + Bp * Op * 4)                          # out (f32)

    out_p = pl.pallas_call(
        _mlp_head_kernel,
        out_shape=jax.ShapeDtypeStruct((Bp, Op), jnp.float32),
        grid=(Bp // tm,),
        in_specs=[
            pl.BlockSpec((tm, Hp), lambda i: (i, 0)),   # x tiled over batch
            resident((Hp, Mp)), resident((1, Mp)),
            resident((Mp, Mp)), resident((1, Mp)),
            resident((Mp, Op)), resident((1, Op)),
        ],
        out_specs=pl.BlockSpec((tm, Op), lambda i: (i, 0)),
        compiler_params=pltpu.CompilerParams(
            dimension_semantics=("parallel",)),          # v7x: shard batch grid over 2 TCs
        cost_estimate=pl.CostEstimate(
            flops=flops, transcendentals=0, bytes_accessed=bytes_accessed),
    )(x_p, w1_p, b1_p, w2_p, b2_p, w3_p, b3_p)

    # Slice padded lanes/rows back off (padded columns are exact zeros + zero bias).
    return out_p[:B, :out_dim]


# --------------------------- Full forward (glue) -----------------------------

@functools.partial(jax.jit, static_argnames=("compute_dtype",))
def expression_predictor_forward(input_ids, attention_mask, params,
                                 *, compute_dtype=jnp.float32):
    """input_ids: (B, S) int32; attention_mask unused by the frozen stand-in."""
    # Frozen "base_model" stand-in: deterministic embedding lookup of the CLS
    # (position 0) token -> (B, H) float32.  (Mirrors last_hidden_state[:, 0].)
    del attention_mask
    cls_tokens = input_ids[:, 0]                                  # (B,)
    cls_embedding = params["embed_table"][cls_tokens]             # (B, H)
    cls_embedding = cls_embedding.astype(jnp.float32)             # .float()

    return mlp_head(
        cls_embedding,
        params["w1"], params["b1"],
        params["w2"], params["b2"],
        params["w3"], params["b3"],
        compute_dtype=compute_dtype,
    )


def init_params(key, vocab_size, hidden_size, mid_dim=218, output_dim=218):
    """Deterministic synthetic parameters.  Weights stored as (in, out)."""
    ks = jax.random.split(key, 7)
    scale = lambda fan_in: 1.0 / jnp.sqrt(jnp.float32(fan_in))
    return {
        "embed_table": jax.random.normal(ks[0], (vocab_size, hidden_size), jnp.float32),
        "w1": jax.random.uniform(ks[1], (hidden_size, mid_dim), jnp.float32, -1, 1) * scale(hidden_size),
        "b1": jax.random.uniform(ks[2], (1, mid_dim), jnp.float32, -1, 1) * scale(hidden_size),
        "w2": jax.random.uniform(ks[3], (mid_dim, mid_dim), jnp.float32, -1, 1) * scale(mid_dim),
        "b2": jax.random.uniform(ks[4], (1, mid_dim), jnp.float32, -1, 1) * scale(mid_dim),
        "w3": jax.random.uniform(ks[5], (mid_dim, output_dim), jnp.float32, -1, 1) * scale(mid_dim),
        "b3": jax.random.uniform(ks[6], (1, output_dim), jnp.float32, -1, 1) * scale(mid_dim),
    }


if __name__ == "__main__":
    key = jax.random.PRNGKey(0)
    k_ids, k_params = jax.random.split(key)

    B, S = 2, 8            # batch, sequence length
    vocab_size = 32
    hidden_size = 32       # base_model.config.hidden_size (small, synthetic)
    output_dim = 218

    input_ids = jax.random.randint(k_ids, (B, S), 0, vocab_size, dtype=jnp.int32)
    attention_mask = jnp.ones((B, S), dtype=jnp.int32)
    params = init_params(k_params, vocab_size, hidden_size, 218, output_dim)

    # f32 path: exact-semantics check against pure-JAX reference.
    out = expression_predictor_forward(input_ids, attention_mask, params)
    out = jax.block_until_ready(out)

    assert out.shape == (B, output_dim), out.shape
    assert out.dtype == jnp.float32, out.dtype

    cls = params["embed_table"][input_ids[:, 0]].astype(jnp.float32)
    h1 = jnp.maximum(cls @ params["w1"] + params["b1"], 0.0)
    h2 = jnp.maximum(h1 @ params["w2"] + params["b2"], 0.0)
    ref = h2 @ params["w3"] + params["b3"]
    assert jnp.allclose(out, ref, atol=1e-4, rtol=1e-4)

    # bf16-MXU path (v6e/v7x: native bf16 MXU, halved weight DMA): smoke run only.
    out_bf16 = expression_predictor_forward(
        input_ids, attention_mask, params, compute_dtype=jnp.bfloat16)
    out_bf16 = jax.block_until_ready(out_bf16)
    assert out_bf16.shape == (B, output_dim), out_bf16.shape
    assert bool(jnp.all(jnp.isfinite(out_bf16)))

    print("KERNEL_OK")
</pallas_src>

<mosaic_0001>
module attributes {stable_mosaic.version = 11 : i64} {
  func.func @_mlp_head_kernel(%arg0: i32, %arg1: memref<8x128xf32, #tpu.memory_space<vmem>>, %arg2: memref<128x256xf32, #tpu.memory_space<vmem>>, %arg3: memref<1x256xf32, #tpu.memory_space<vmem>>, %arg4: memref<256x256xf32, #tpu.memory_space<vmem>>, %arg5: memref<1x256xf32, #tpu.memory_space<vmem>>, %arg6: memref<256x256xf32, #tpu.memory_space<vmem>>, %arg7: memref<1x256xf32, #tpu.memory_space<vmem>>, %arg8: memref<8x256xf32, #tpu.memory_space<vmem>>) attributes {dimension_semantics = [#tpu.dimension_semantics<parallel>], iteration_bounds = array<i64: 1>, scalar_prefetch = 0 : i64, scratch_operands = 0 : i64, tpu.core_type = #tpu.core_type<tc>, window_params = [{transform_indices = @transform_0, window_bounds = array<i64: 8, 128>}, {pipeline_mode = #tpu.pipeline_mode<synchronous>, transform_indices = @transform_1, window_bounds = array<i64: 128, 256>}, {pipeline_mode = #tpu.pipeline_mode<synchronous>, transform_indices = @transform_2, window_bounds = array<i64: 1, 256>}, {pipeline_mode = #tpu.pipeline_mode<synchronous>, transform_indices = @transform_3, window_bounds = array<i64: 256, 256>}, {pipeline_mode = #tpu.pipeline_mode<synchronous>, transform_indices = @transform_4, window_bounds = array<i64: 1, 256>}, {pipeline_mode = #tpu.pipeline_mode<synchronous>, transform_indices = @transform_5, window_bounds = array<i64: 256, 256>}, {pipeline_mode = #tpu.pipeline_mode<synchronous>, transform_indices = @transform_6, window_bounds = array<i64: 1, 256>}, {transform_indices = @transform_7, window_bounds = array<i64: 8, 256>}]} {
    %c0 = arith.constant 0 : index
    %c0_0 = arith.constant 0 : index
    %0 = vector.load %arg1[%c0, %c0_0] : memref<8x128xf32, #tpu.memory_space<vmem>>, vector<8x128xf32>
    %c0_1 = arith.constant 0 : index
    %c0_2 = arith.constant 0 : index
    %1 = vector.load %arg2[%c0_1, %c0_2] : memref<128x256xf32, #tpu.memory_space<vmem>>, vector<128x256xf32>
    %cst = arith.constant dense<0.000000e+00> : vector<8x256xf32>
    %2 = tpu.matmul %0, %1, %cst {dimension_numbers = #tpu.dot_dimension_numbers<[1], [0], [0], [1], [0, 0, 1, 1], [], []>} : vector<8x128xf32>, vector<128x256xf32>, vector<8x256xf32> -> vector<8x256xf32>
    %c0_3 = arith.constant 0 : index
    %c0_4 = arith.constant 0 : index
    %3 = vector.load %arg3[%c0_3, %c0_4] : memref<1x256xf32, #tpu.memory_space<vmem>>, vector<1x256xf32>
    %4 = vector.broadcast %3 : vector<1x256xf32> to vector<8x256xf32>
    %5 = arith.addf %2, %4 : vector<8x256xf32>
    %cst_5 = arith.constant 0.000000e+00 : f32
    %6 = vector.broadcast %cst_5 : f32 to vector<8x256xf32>
    %7 = arith.maximumf %5, %6 : vector<8x256xf32>
    %c0_6 = arith.constant 0 : index
    %c0_7 = arith.constant 0 : index
    %8 = vector.load %arg4[%c0_6, %c0_7] : memref<256x256xf32, #tpu.memory_space<vmem>>, vector<256x256xf32>
    %cst_8 = arith.constant dense<0.000000e+00> : vector<8x256xf32>
    %9 = tpu.matmul %7, %8, %cst_8 {dimension_numbers = #tpu.dot_dimension_numbers<[1], [0], [0], [1], [0, 0, 1, 1], [], []>} : vector<8x256xf32>, vector<256x256xf32>, vector<8x256xf32> -> vector<8x256xf32>
    %c0_9 = arith.constant 0 : index
    %c0_10 = arith.constant 0 : index
    %10 = vector.load %arg5[%c0_9, %c0_10] : memref<1x256xf32, #tpu.memory_space<vmem>>, vector<1x256xf32>
    %11 = vector.broadcast %10 : vector<1x256xf32> to vector<8x256xf32>
    %12 = arith.addf %9, %11 : vector<8x256xf32>
    %cst_11 = arith.constant 0.000000e+00 : f32
    %13 = vector.broadcast %cst_11 : f32 to vector<8x256xf32>
    %14 = arith.maximumf %12, %13 : vector<8x256xf32>
    %c0_12 = arith.constant 0 : index
    %c0_13 = arith.constant 0 : index
    %15 = vector.load %arg6[%c0_12, %c0_13] : memref<256x256xf32, #tpu.memory_space<vmem>>, vector<256x256xf32>
    %cst_14 = arith.constant dense<0.000000e+00> : vector<8x256xf32>
    %16 = tpu.matmul %14, %15, %cst_14 {dimension_numbers = #tpu.dot_dimension_numbers<[1], [0], [0], [1], [0, 0, 1, 1], [], []>} : vector<8x256xf32>, vector<256x256xf32>, vector<8x256xf32> -> vector<8x256xf32>
    %c0_15 = arith.constant 0 : index
    %c0_16 = arith.constant 0 : index
    %17 = vector.load %arg7[%c0_15, %c0_16] : memref<1x256xf32, #tpu.memory_space<vmem>>, vector<1x256xf32>
    %18 = vector.broadcast %17 : vector<1x256xf32> to vector<8x256xf32>
    %19 = arith.addf %16, %18 : vector<8x256xf32>
    %c0_17 = arith.constant 0 : index
    %c0_18 = arith.constant 0 : index
    %20 = vector.load %arg8[%c0_17, %c0_18] : memref<8x256xf32, #tpu.memory_space<vmem>>, vector<8x256xf32>
    tpu.vector_store %arg8[%c0_17, %c0_18], %19 {strides = array<i32>} : memref<8x256xf32, #tpu.memory_space<vmem>>, vector<8x256xf32>,
    return
  }
  func.func @transform_0(%arg0: i32) -> (i32, i32) {
    %c0_i32 = arith.constant 0 : i32
    %c0_i32_0 = arith.constant 0 : i32
    return %arg0, %c0_i32 : i32, i32
  }
  func.func @transform_1(%arg0: i32) -> (i32, i32) {
    %c0_i32 = arith.constant 0 : i32
    %c0_i32_0 = arith.constant 0 : i32
    %c0_i32_1 = arith.constant 0 : i32
    return %c0_i32, %c0_i32_0 : i32, i32
  }
  func.func @transform_2(%arg0: i32) -> (i32, i32) {
    %c0_i32 = arith.constant 0 : i32
    %c0_i32_0 = arith.constant 0 : i32
    %c0_i32_1 = arith.constant 0 : i32
    return %c0_i32, %c0_i32_0 : i32, i32
  }
  func.func @transform_3(%arg0: i32) -> (i32, i32) {
    %c0_i32 = arith.constant 0 : i32
    %c0_i32_0 = arith.constant 0 : i32
    %c0_i32_1 = arith.constant 0 : i32
    return %c0_i32, %c0_i32_0 : i32, i32
  }
  func.func @transform_4(%arg0: i32) -> (i32, i32) {
    %c0_i32 = arith.constant 0 : i32
    %c0_i32_0 = arith.constant 0 : i32
    %c0_i32_1 = arith.constant 0 : i32
    return %c0_i32, %c0_i32_0 : i32, i32
  }
  func.func @transform_5(%arg0: i32) -> (i32, i32) {
    %c0_i32 = arith.constant 0 : i32
    %c0_i32_0 = arith.constant 0 : i32
    %c0_i32_1 = arith.constant 0 : i32
    return %c0_i32, %c0_i32_0 : i32, i32
  }
  func.func @transform_6(%arg0: i32) -> (i32, i32) {
    %c0_i32 = arith.constant 0 : i32
    %c0_i32_0 = arith.constant 0 : i32
    %c0_i32_1 = arith.constant 0 : i32
    return %c0_i32, %c0_i32_0 : i32, i32
  }
  func.func @transform_7(%arg0: i32) -> (i32, i32) {
    %c0_i32 = arith.constant 0 : i32
    %c0_i32_0 = arith.constant 0 : i32
    return %arg0, %c0_i32 : i32, i32
  }
}

</mosaic_0001>

<llo_original>
// kernel: expression_predictor_forward.1
$region0: #{expression_predictor_forward.1}
  #allocation0 [shape = 'u32[]', space=smem, size = 0x4, offset = 0x4, fixed_abs, tag = 'smem constant byte address 0x4 - core index']
  #allocation1 [shape = 'u32[144,128]{1,0:T(1,128)}', space=vmem, size = 0x12000, scoped, tag = 'internal scratch']
  %s0 = inlined_call_operand.vmem [shape: f32[8,128], index: 0, kind: input, shape index: {}]
  %s1 = inlined_call_operand.vmem [shape: f32[128,256], index: 1, kind: input, shape index: {}]
  %s2 = inlined_call_operand.vmem [shape: f32[1,256], index: 2, kind: input, shape index: {}]
  %s3 = inlined_call_operand.vmem [shape: f32[256,256], index: 3, kind: input, shape index: {}]
  %s4 = inlined_call_operand.vmem [shape: f32[1,256], index: 4, kind: input, shape index: {}]
  %s5 = inlined_call_operand.vmem [shape: f32[256,256], index: 5, kind: input, shape index: {}]
  %s6 = inlined_call_operand.vmem [shape: f32[1,256], index: 6, kind: input, shape index: {}]
  %s7 = inlined_call_operand.vmem [shape: f32[8,256], index: 7, kind: output, shape index: {}]
  %s8 = sld [smem:[#allocation0]]
  $region38: #{expression_predictor_forward.1} parent=0
    _
  %s10 = ssub.s32 1, %s8
  %s11 = scalar_select 0, %s10, %s8
  // Predicated region
  $region2: #{expression_predictor_forward.1} parent=0 // pred_check
    _
  $region3: #{expression_predictor_forward.1} parent=0 // pred_check_branch
    %13 = sbr.rel (0) target = $region5
  $region4: #{expression_predictor_forward.1} parent=0 // pred_region
    _
  $region5: #{expression_predictor_forward.1} parent=0 // pred_fallthru
    _
  // Predicated region
  $region6: #{expression_predictor_forward.1} parent=0 // pred_check
    _
  $region7: #{expression_predictor_forward.1} parent=0 // pred_check_branch
    %15 = sbr.rel (0) target = $region9
  $region8: #{expression_predictor_forward.1} parent=0 // pred_region
    _
  $region9: #{expression_predictor_forward.1} parent=0 // pred_fallthru
    _
  // Predicated region
  $region10: #{expression_predictor_forward.1} parent=0 // pred_check
    _
  $region11: #{expression_predictor_forward.1} parent=0 // pred_check_branch
    %17 = sbr.rel (0) target = $region13
  $region12: #{expression_predictor_forward.1} parent=0 // pred_region
    _
  $region13: #{expression_predictor_forward.1} parent=0 // pred_fallthru
    _
  // Predicated region
  $region14: #{expression_predictor_forward.1} parent=0 // pred_check
    _
  $region15: #{expression_predictor_forward.1} parent=0 // pred_check_branch
    %19 = sbr.rel (0) target = $region17
  $region16: #{expression_predictor_forward.1} parent=0 // pred_region
    _
  $region17: #{expression_predictor_forward.1} parent=0 // pred_fallthru
    _
  // Predicated region
  $region18: #{expression_predictor_forward.1} parent=0 // pred_check
    _
  $region19: #{expression_predictor_forward.1} parent=0 // pred_check_branch
    %21 = sbr.rel (0) target = $region21
  $region20: #{expression_predictor_forward.1} parent=0 // pred_region
    _
  $region21: #{expression_predictor_forward.1} parent=0 // pred_fallthru
    _
  // Predicated region
  $region22: #{expression_predictor_forward.1} parent=0 // pred_check
    _
  $region23: #{expression_predictor_forward.1} parent=0 // pred_check_branch
    %23 = sbr.rel (0) target = $region25
  $region24: #{expression_predictor_forward.1} parent=0 // pred_region
    _
  $region25: #{expression_predictor_forward.1} parent=0 // pred_fallthru
    _
  // Predicated region
  $region26: #{expression_predictor_forward.1} parent=0 // pred_check
    _
  $region27: #{expression_predictor_forward.1} parent=0 // pred_check_branch
    %25 = sbr.rel (0) target = $region29
  $region28: #{expression_predictor_forward.1} parent=0 // pred_region
    _
  $region29: #{expression_predictor_forward.1} parent=0 // pred_fallthru
    _
  %v26 = vld [vmem:[%s0] sm:$0xff]
  %v27 = vld [vmem:[%s1] sm:$0xff]
  %v28 = vld [vmem:[%s1 + $0x8] sm:$0xff]
  %v29 = vld [vmem:[%s1 + $0x10] sm:$0xff]
  %v30 = vld [vmem:[%s1 + $0x18] sm:$0xff]
  %v31 = vld [vmem:[%s1 + $0x20] sm:$0xff]
  %v32 = vld [vmem:[%s1 + $0x28] sm:$0xff]
  %v33 = vld [vmem:[%s1 + $0x30] sm:$0xff]
  %v34 = vld [vmem:[%s1 + $0x38] sm:$0xff]
  %v35 = vld [vmem:[%s1 + $0x40] sm:$0xff]
  %v36 = vld [vmem:[%s1 + $0x48] sm:$0xff]
  %v37 = vld [vmem:[%s1 + $0x50] sm:$0xff]
  %v38 = vld [vmem:[%s1 + $0x58] sm:$0xff]
  %v39 = vld [vmem:[%s1 + $0x60] sm:$0xff]
  %v40 = vld [vmem:[%s1 + $0x68] sm:$0xff]
  %v41 = vld [vmem:[%s1 + $0x70] sm:$0xff]
  %v42 = vld [vmem:[%s1 + $0x78] sm:$0xff]
  %v43 = vld [vmem:[%s1 + $0x80] sm:$0xff]
  %v44 = vld [vmem:[%s1 + $0x88] sm:$0xff]
  %v45 = vld [vmem:[%s1 + $0x90] sm:$0xff]
  %v46 = vld [vmem:[%s1 + $0x98] sm:$0xff]
  %v47 = vld [vmem:[%s1 + $0xa0] sm:$0xff]
  %v48 = vld [vmem:[%s1 + $0xa8] sm:$0xff]
  %v49 = vld [vmem:[%s1 + $0xb0] sm:$0xff]
  %v50 = vld [vmem:[%s1 + $0xb8] sm:$0xff]
  %v51 = vld [vmem:[%s1 + $0xc0] sm:$0xff]
  %v52 = vld [vmem:[%s1 + $0xc8] sm:$0xff]
  %v53 = vld [vmem:[%s1 + $0xd0] sm:$0xff]
  %v54 = vld [vmem:[%s1 + $0xd8] sm:$0xff]
  %v55 = vld [vmem:[%s1 + $0xe0] sm:$0xff]
  %v56 = vld [vmem:[%s1 + $0xe8] sm:$0xff]
  %v57 = vld [vmem:[%s1 + $0xf0] sm:$0xff]
  %v58 = vld [vmem:[%s1 + $0xf8] sm:$0xff]
  %v59 = vld [vmem:[%s2] sm:$0x3]
  %v61 = vlaneseq
  %v62 = vshrl.u32 %v61, 7
  %v63 = vsub.s32 0, %v62
  %v64 = vrot.slane %v59, %v63
  %v65 = vlaneseq
  %v66 = vshrl.u32 %v65, 7
  %v67 = vsub.s32 1, %v66
  %v68 = vrot.slane %v59, %v67
  %71 = vmatprep.subr.mxu0 %v28
  %72 = vmatpush1.msra.mxu0 %v27
  %73 = vmatprep.subr.mxu0 %v30
  %74 = vmatpush1.msra.mxu0 %v29
  %75 = vmatprep.subr.mxu0 %v32
  %76 = vmatpush1.msra.mxu0 %v31
  %77 = vmatprep.subr.mxu0 %v34
  %78 = vmatpush1.msra.mxu0 %v33
  %79 = vmatprep.subr.mxu0 %v36
  %80 = vmatpush1.msra.mxu0 %v35
  %81 = vmatprep.subr.mxu0 %v38
  %82 = vmatpush1.msra.mxu0 %v37
  %83 = vmatprep.subr.mxu0 %v40
  %84 = vmatpush1.msra.mxu0 %v39
  %85 = vmatprep.subr.mxu0 %v42
  %86 = vmatpush1.msra.mxu0 %v41
  %87 = vmatprep.subr.mxu0 %v44
  %88 = vmatpush1.msra.mxu0 %v43
  %89 = vmatprep.subr.mxu0 %v46
  %90 = vmatpush1.msra.mxu0 %v45
  %91 = vmatprep.subr.mxu0 %v48
  %92 = vmatpush1.msra.mxu0 %v47
  %93 = vmatprep.subr.mxu0 %v50
  %94 = vmatpush1.msra.mxu0 %v49
  %95 = vmatprep.subr.mxu0 %v52
  %96 = vmatpush1.msra.mxu0 %v51
  %97 = vmatprep.subr.mxu0 %v54
  %98 = vmatpush1.msra.mxu0 %v53
  %99 = vmatprep.subr.mxu0 %v56
  %100 = vmatpush1.msra.mxu0 %v55
  %101 = vmatprep.subr.mxu0 %v58
  %102 = vmatpush1.msra.mxu0 %v57
  %103 = vmatprep.subr.mxu0 0.0
  %104 = vmatpush1.msra.mxu0 0.0
  %105 = vmatprep.subr.mxu0 0.0
  %106 = vmatpush1.msra.mxu0 0.0
  %107 = vmatprep.subr.mxu0 0.0
  %108 = vmatpush1.msra.mxu0 0.0
  %109 = vmatprep.subr.mxu0 0.0
  %110 = vmatpush1.msra.mxu0 0.0
  %111 = vmatprep.subr.mxu0 0.0
  %112 = vmatpush1.msra.mxu0 0.0
  %113 = vmatprep.subr.mxu0 0.0
  %114 = vmatpush1.msra.mxu0 0.0
  %115 = vmatprep.subr.mxu0 0.0
  %116 = vmatpush1.msra.mxu0 0.0
  %117 = vmatprep.subr.mxu0 0.0
  %118 = vmatpush1.msra.mxu0 0.0
  %119 = vmatprep.subr.mxu0 0.0
  %120 = vmatpush1.msra.mxu0 0.0
  %121 = vmatprep.subr.mxu0 0.0
  %122 = vmatpush1.msra.mxu0 0.0
  %123 = vmatprep.subr.mxu0 0.0
  %124 = vmatpush1.msra.mxu0 0.0
  %125 = vmatprep.subr.mxu0 0.0
  %126 = vmatpush1.msra.mxu0 0.0
  %127 = vmatprep.subr.mxu0 0.0
  %128 = vmatpush1.msra.mxu0 0.0
  %129 = vmatprep.subr.mxu0 0.0
  %130 = vmatpush1.msra.mxu0 0.0
  %131 = vmatprep.subr.mxu0 0.0
  %132 = vmatpush1.msra.mxu0 0.0
  %133 = vmatprep.subr.mxu0 0.0
  %134 = vmatpush1.msra.mxu0 0.0
  %135 = vmatprep.mubr.f32.mxu0 0.0
  %136 = vmatmul.mubr.f32.gmra.mrb[0].mxu0 %v26
  %v137 = vpop.f32.mrb[0].mxu0
  %v138 = vadd.f32 %v64, %v137
  %v139 = vpop.f32.mrb[0].mxu0
  %v140 = vadd.f32 %v68, %v139
  %141 = vdwg.mxu0
  %v142 = vmax.f32 %v138, 0.0
  %v143 = vmax.f32 %v140, 0.0
  %v144 = vld [vmem:[%s3] sm:$0xff]
  %v145 = vld [vmem:[%s3 + $0x8] sm:$0xff]
  %v146 = vld [vmem:[%s3 + $0x10] sm:$0xff]
  %v147 = vld [vmem:[%s3 + $0x18] sm:$0xff]
  %v148 = vld [vmem:[%s3 + $0x20] sm:$0xff]
  %v149 = vld [vmem:[%s3 + $0x28] sm:$0xff]
  %v150 = vld [vmem:[%s3 + $0x30] sm:$0xff]
  %v151 = vld [vmem:[%s3 + $0x38] sm:$0xff]
  %v152 = vld [vmem:[%s3 + $0x40] sm:$0xff]
  %v153 = vld [vmem:[%s3 + $0x48] sm:$0xff]
  %v154 = vld [vmem:[%s3 + $0x50] sm:$0xff]
  %v155 = vld [vmem:[%s3 + $0x58] sm:$0xff]
  %v156 = vld [vmem:[%s3 + $0x60] sm:$0xff]
  %v157 = vld [vmem:[%s3 + $0x68] sm:$0xff]
  %v158 = vld [vmem:[%s3 + $0x70] sm:$0xff]
  %v159 = vld [vmem:[%s3 + $0x78] sm:$0xff]
  %v160 = vld [vmem:[%s3 + $0x80] sm:$0xff]
  %v161 = vld [vmem:[%s3 + $0x88] sm:$0xff]
  %v162 = vld [vmem:[%s3 + $0x90] sm:$0xff]
  %v163 = vld [vmem:[%s3 + $0x98] sm:$0xff]
  %v164 = vld [vmem:[%s3 + $0xa0] sm:$0xff]
  %v165 = vld [vmem:[%s3 + $0xa8] sm:$0xff]
  %v166 = vld [vmem:[%s3 + $0xb0] sm:$0xff]
  %v167 = vld [vmem:[%s3 + $0xb8] sm:$0xff]
  %v168 = vld [vmem:[%s3 + $0xc0] sm:$0xff]
  %v169 = vld [vmem:[%s3 + $0xc8] sm:$0xff]
  %v170 = vld [vmem:[%s3 + $0xd0] sm:$0xff]
  %v171 = vld [vmem:[%s3 + $0xd8] sm:$0xff]
  %v172 = vld [vmem:[%s3 + $0xe0] sm:$0xff]
  %v173 = vld [vmem:[%s3 + $0xe8] sm:$0xff]
  %v174 = vld [vmem:[%s3 + $0xf0] sm:$0xff]
  %v175 = vld [vmem:[%s3 + $0xf8] sm:$0xff]
  %v176 = vld [vmem:[%s3 + $0x100] sm:$0xff]
  %v177 = vld [vmem:[%s3 + $0x108] sm:$0xff]
  %v178 = vld [vmem:[%s3 + $0x110] sm:$0xff]
  %v179 = vld [vmem:[%s3 + $0x118] sm:$0xff]
  %v180 = vld [vmem:[%s3 + $0x120] sm:$0xff]
  %v181 = vld [vmem:[%s3 + $0x128] sm:$0xff]
  %v182 = vld [vmem:[%s3 + $0x130] sm:$0xff]
  %v183 = vld [vmem:[%s3 + $0x138] sm:$0xff]
  %v184 = vld [vmem:[%s3 + $0x140] sm:$0xff]
  %v185 = vld [vmem:[%s3 + $0x148] sm:$0xff]
  %v186 = vld [vmem:[%s3 + $0x150] sm:$0xff]
  %v187 = vld [vmem:[%s3 + $0x158] sm:$0xff]
  %v188 = vld [vmem:[%s3 + $0x160] sm:$0xff]
  %v189 = vld [vmem:[%s3 + $0x168] sm:$0xff]
  %v190 = vld [vmem:[%s3 + $0x170] sm:$0xff]
  %v191 = vld [vmem:[%s3 + $0x178] sm:$0xff]
  %v192 = vld [vmem:[%s3 + $0x180] sm:$0xff]
  %v193 = vld [vmem:[%s3 + $0x188] sm:$0xff]
  %v194 = vld [vmem:[%s3 + $0x190] sm:$0xff]
  %v195 = vld [vmem:[%s3 + $0x198] sm:$0xff]
  %v196 = vld [vmem:[%s3 + $0x1a0] sm:$0xff]
  %v197 = vld [vmem:[%s3 + $0x1a8] sm:$0xff]
  %v198 = vld [vmem:[%s3 + $0x1b0] sm:$0xff]
  %v199 = vld [vmem:[%s3 + $0x1b8] sm:$0xff]
  %v200 = vld [vmem:[%s3 + $0x1c0] sm:$0xff]
  %v201 = vld [vmem:[%s3 + $0x1c8] sm:$0xff]
  %v202 = vld [vmem:[%s3 + $0x1d0] sm:$0xff]
  %v203 = vld [vmem:[%s3 + $0x1d8] sm:$0xff]
  %v204 = vld [vmem:[%s3 + $0x1e0] sm:$0xff]
  %v205 = vld [vmem:[%s3 + $0x1e8] sm:$0xff]
  %v206 = vld [vmem:[%s3 + $0x1f0] sm:$0xff]
  %v207 = vld [vmem:[%s3 + $0x1f8] sm:$0xff]
  %v208 = vld [vmem:[%s4] sm:$0x3]
  %v210 = vlaneseq
  %v211 = vshrl.u32 %v210, 7
  %v212 = vsub.s32 0, %v211
  %v213 = vrot.slane %v208, %v212
  %v214 = vlaneseq
  %v215 = vshrl.u32 %v214, 7
  %v216 = vsub.s32 1, %v215
  %v217 = vrot.slane %v208, %v216
  %220 = vmatprep.subr.mxu0 %v145
  %221 = vmatpush1.msra.mxu0 %v144
  %222 = vmatprep.subr.mxu0 %v147
  %223 = vmatpush1.msra.mxu0 %v146
  %224 = vmatprep.subr.mxu0 %v149
  %225 = vmatpush1.msra.mxu0 %v148
  %226 = vmatprep.subr.mxu0 %v151
  %227 = vmatpush1.msra.mxu0 %v150
  %228 = vmatprep.subr.mxu0 %v153
  %229 = vmatpush1.msra.mxu0 %v152
  %230 = vmatprep.subr.mxu0 %v155
  %231 = vmatpush1.msra.mxu0 %v154
  %232 = vmatprep.subr.mxu0 %v157
  %233 = vmatpush1.msra.mxu0 %v156
  %234 = vmatprep.subr.mxu0 %v159
  %235 = vmatpush1.msra.mxu0 %v158
  %236 = vmatprep.subr.mxu0 %v161
  %237 = vmatpush1.msra.mxu0 %v160
  %238 = vmatprep.subr.mxu0 %v163
  %239 = vmatpush1.msra.mxu0 %v162
  %240 = vmatprep.subr.mxu0 %v165
  %241 = vmatpush1.msra.mxu0 %v164
  %242 = vmatprep.subr.mxu0 %v167
  %243 = vmatpush1.msra.mxu0 %v166
  %244 = vmatprep.subr.mxu0 %v169
  %245 = vmatpush1.msra.mxu0 %v168
  %246 = vmatprep.subr.mxu0 %v171
  %247 = vmatpush1.msra.mxu0 %v170
  %248 = vmatprep.subr.mxu0 %v173
  %249 = vmatpush1.msra.mxu0 %v172
  %250 = vmatprep.subr.mxu0 %v175
  %251 = vmatpush1.msra.mxu0 %v174
  %252 = vmatprep.subr.mxu0 %v177
  %253 = vmatpush1.msra.mxu0 %v176
  %254 = vmatprep.subr.mxu0 %v179
  %255 = vmatpush1.msra.mxu0 %v178
  %256 = vmatprep.subr.mxu0 %v181
  %257 = vmatpush1.msra.mxu0 %v180
  %258 = vmatprep.subr.mxu0 %v183
  %259 = vmatpush1.msra.mxu0 %v182
  %260 = vmatprep.subr.mxu0 %v185
  %261 = vmatpush1.msra.mxu0 %v184
  %262 = vmatprep.subr.mxu0 %v187
  %263 = vmatpush1.msra.mxu0 %v186
  %264 = vmatprep.subr.mxu0 %v189
  %265 = vmatpush1.msra.mxu0 %v188
  %266 = vmatprep.subr.mxu0 %v191
  %267 = vmatpush1.msra.mxu0 %v190
  %268 = vmatprep.subr.mxu0 %v193
  %269 = vmatpush1.msra.mxu0 %v192
  %270 = vmatprep.subr.mxu0 %v195
  %271 = vmatpush1.msra.mxu0 %v194
  %272 = vmatprep.subr.mxu0 %v197
  %273 = vmatpush1.msra.mxu0 %v196
  %274 = vmatprep.subr.mxu0 %v199
  %275 = vmatpush1.msra.mxu0 %v198
  %276 = vmatprep.subr.mxu0 %v201
  %277 = vmatpush1.msra.mxu0 %v200
  %278 = vmatprep.subr.mxu0 %v203
  %279 = vmatpush1.msra.mxu0 %v202
  %280 = vmatprep.subr.mxu0 %v205
  %281 = vmatpush1.msra.mxu0 %v204
  %282 = vmatprep.subr.mxu0 %v207
  %283 = vmatpush1.msra.mxu0 %v206
  %284 = vmatprep.mubr.f32.mxu0 %v143
  %285 = vmatmul.mubr.f32.gmra.mrb[0].mxu0 %v142
  %v286 = vpop.f32.mrb[0].mxu0
  %v287 = vadd.f32 %v213, %v286
  %v288 = vpop.f32.mrb[0].mxu0
  %v289 = vadd.f32 %v217, %v288
  %290 = vdwg.mxu0
  %v291 = vmax.f32 %v287, 0.0
  %v292 = vmax.f32 %v289, 0.0
  %v293 = vld [vmem:[%s5] sm:$0xff]
  %v294 = vld [vmem:[%s5 + $0x8] sm:$0xff]
  %v295 = vld [vmem:[%s5 + $0x10] sm:$0xff]
  %v296 = vld [vmem:[%s5 + $0x18] sm:$0xff]
  %v297 = vld [vmem:[%s5 + $0x20] sm:$0xff]
  %v298 = vld [vmem:[%s5 + $0x28] sm:$0xff]
  %v299 = vld [vmem:[%s5 + $0x30] sm:$0xff]
  %v300 = vld [vmem:[%s5 + $0x38] sm:$0xff]
  %v301 = vld [vmem:[%s5 + $0x40] sm:$0xff]
  %v302 = vld [vmem:[%s5 + $0x48] sm:$0xff]
  %v303 = vld [vmem:[%s5 + $0x50] sm:$0xff]
  %v304 = vld [vmem:[%s5 + $0x58] sm:$0xff]
  %v305 = vld [vmem:[%s5 + $0x60] sm:$0xff]
  %v306 = vld [vmem:[%s5 + $0x68] sm:$0xff]
  %v307 = vld [vmem:[%s5 + $0x70] sm:$0xff]
  %v308 = vld [vmem:[%s5 + $0x78] sm:$0xff]
  %v309 = vld [vmem:[%s5 + $0x80] sm:$0xff]
  %v310 = vld [vmem:[%s5 + $0x88] sm:$0xff]
  %v311 = vld [vmem:[%s5 + $0x90] sm:$0xff]
  %v312 = vld [vmem:[%s5 + $0x98] sm:$0xff]
  %v313 = vld [vmem:[%s5 + $0xa0] sm:$0xff]
  %v314 = vld [vmem:[%s5 + $0xa8] sm:$0xff]
  %v315 = vld [vmem:[%s5 + $0xb0] sm:$0xff]
  %v316 = vld [vmem:[%s5 + $0xb8] sm:$0xff]
  %v317 = vld [vmem:[%s5 + $0xc0] sm:$0xff]
  %v318 = vld [vmem:[%s5 + $0xc8] sm:$0xff]
  %v319 = vld [vmem:[%s5 + $0xd0] sm:$0xff]
  %v320 = vld [vmem:[%s5 + $0xd8] sm:$0xff]
  %v321 = vld [vmem:[%s5 + $0xe0] sm:$0xff]
  %v322 = vld [vmem:[%s5 + $0xe8] sm:$0xff]
  %v323 = vld [vmem:[%s5 + $0xf0] sm:$0xff]
  %v324 = vld [vmem:[%s5 + $0xf8] sm:$0xff]
  %v325 = vld [vmem:[%s5 + $0x100] sm:$0xff]
  %v326 = vld [vmem:[%s5 + $0x108] sm:$0xff]
  %v327 = vld [vmem:[%s5 + $0x110] sm:$0xff]
  %v328 = vld [vmem:[%s5 + $0x118] sm:$0xff]
  %v329 = vld [vmem:[%s5 + $0x120] sm:$0xff]
  %v330 = vld [vmem:[%s5 + $0x128] sm:$0xff]
  %v331 = vld [vmem:[%s5 + $0x130] sm:$0xff]
  %v332 = vld [vmem:[%s5 + $0x138] sm:$0xff]
  %v333 = vld [vmem:[%s5 + $0x140] sm:$0xff]
  %v334 = vld [vmem:[%s5 + $0x148] sm:$0xff]
  %v335 = vld [vmem:[%s5 + $0x150] sm:$0xff]
  %v336 = vld [vmem:[%s5 + $0x158] sm:$0xff]
  %v337 = vld [vmem:[%s5 + $0x160] sm:$0xff]
  %v338 = vld [vmem:[%s5 + $0x168] sm:$0xff]
  %v339 = vld [vmem:[%s5 + $0x170] sm:$0xff]
  %v340 = vld [vmem:[%s5 + $0x178] sm:$0xff]
  %v341 = vld [vmem:[%s5 + $0x180] sm:$0xff]
  %v342 = vld [vmem:[%s5 + $0x188] sm:$0xff]
  %v343 = vld [vmem:[%s5 + $0x190] sm:$0xff]
  %v344 = vld [vmem:[%s5 + $0x198] sm:$0xff]
  %v345 = vld [vmem:[%s5 + $0x1a0] sm:$0xff]
  %v346 = vld [vmem:[%s5 + $0x1a8] sm:$0xff]
  %v347 = vld [vmem:[%s5 + $0x1b0] sm:$0xff]
  %v348 = vld [vmem:[%s5 + $0x1b8] sm:$0xff]
  %v349 = vld [vmem:[%s5 + $0x1c0] sm:$0xff]
  %v350 = vld [vmem:[%s5 + $0x1c8] sm:$0xff]
  %v351 = vld [vmem:[%s5 + $0x1d0] sm:$0xff]
  %v352 = vld [vmem:[%s5 + $0x1d8] sm:$0xff]
  %v353 = vld [vmem:[%s5 + $0x1e0] sm:$0xff]
  %v354 = vld [vmem:[%s5 + $0x1e8] sm:$0xff]
  %v355 = vld [vmem:[%s5 + $0x1f0] sm:$0xff]
  %v356 = vld [vmem:[%s5 + $0x1f8] sm:$0xff]
  %v357 = vld [vmem:[%s6] sm:$0x3]
  %v359 = vlaneseq
  %v360 = vshrl.u32 %v359, 7
  %v361 = vsub.s32 0, %v360
  %v362 = vrot.slane %v357, %v361
  %v363 = vlaneseq
  %v364 = vshrl.u32 %v363, 7
  %v365 = vsub.s32 1, %v364
  %v366 = vrot.slane %v357, %v365
  %369 = vmatprep.subr.mxu0 %v294
  %370 = vmatpush1.msra.mxu0 %v293
  %371 = vmatprep.subr.mxu0 %v296
  %372 = vmatpush1.msra.mxu0 %v295
  %373 = vmatprep.subr.mxu0 %v298
  %374 = vmatpush1.msra.mxu0 %v297
  %375 = vmatprep.subr.mxu0 %v300
  %376 = vmatpush1.msra.mxu0 %v299
  %377 = vmatprep.subr.mxu0 %v302
  %378 = vmatpush1.msra.mxu0 %v301
  %379 = vmatprep.subr.mxu0 %v304
  %380 = vmatpush1.msra.mxu0 %v303
  %381 = vmatprep.subr.mxu0 %v306
  %382 = vmatpush1.msra.mxu0 %v305
  %383 = vmatprep.subr.mxu0 %v308
  %384 = vmatpush1.msra.mxu0 %v307
  %385 = vmatprep.subr.mxu0 %v310
  %386 = vmatpush1.msra.mxu0 %v309
  %387 = vmatprep.subr.mxu0 %v312
  %388 = vmatpush1.msra.mxu0 %v311
  %389 = vmatprep.subr.mxu0 %v314
  %390 = vmatpush1.msra.mxu0 %v313
  %391 = vmatprep.subr.mxu0 %v316
  %392 = vmatpush1.msra.mxu0 %v315
  %393 = vmatprep.subr.mxu0 %v318
  %394 = vmatpush1.msra.mxu0 %v317
  %395 = vmatprep.subr.mxu0 %v320
  %396 = vmatpush1.msra.mxu0 %v319
  %397 = vmatprep.subr.mxu0 %v322
  %398 = vmatpush1.msra.mxu0 %v321
  %399 = vmatprep.subr.mxu0 %v324
  %400 = vmatpush1.msra.mxu0 %v323
  %401 = vmatprep.subr.mxu0 %v326
  %402 = vmatpush1.msra.mxu0 %v325
  %403 = vmatprep.subr.mxu0 %v328
  %404 = vmatpush1.msra.mxu0 %v327
  %405 = vmatprep.subr.mxu0 %v330
  %406 = vmatpush1.msra.mxu0 %v329
  %407 = vmatprep.subr.mxu0 %v332
  %408 = vmatpush1.msra.mxu0 %v331
  %409 = vmatprep.subr.mxu0 %v334
  %410 = vmatpush1.msra.mxu0 %v333
  %411 = vmatprep.subr.mxu0 %v336
  %412 = vmatpush1.msra.mxu0 %v335
  %413 = vmatprep.subr.mxu0 %v338
  %414 = vmatpush1.msra.mxu0 %v337
  %415 = vmatprep.subr.mxu0 %v340
  %416 = vmatpush1.msra.mxu0 %v339
  %417 = vmatprep.subr.mxu0 %v342
  %418 = vmatpush1.msra.mxu0 %v341
  %419 = vmatprep.subr.mxu0 %v344
  %420 = vmatpush1.msra.mxu0 %v343
  %421 = vmatprep.subr.mxu0 %v346
  %422 = vmatpush1.msra.mxu0 %v345
  %423 = vmatprep.subr.mxu0 %v348
  %424 = vmatpush1.msra.mxu0 %v347
  %425 = vmatprep.subr.mxu0 %v350
  %426 = vmatpush1.msra.mxu0 %v349
  %427 = vmatprep.subr.mxu0 %v352
  %428 = vmatpush1.msra.mxu0 %v351
  %429 = vmatprep.subr.mxu0 %v354
  %430 = vmatpush1.msra.mxu0 %v353
  %431 = vmatprep.subr.mxu0 %v356
  %432 = vmatpush1.msra.mxu0 %v355
  %433 = vmatprep.mubr.f32.mxu0 %v292
  %434 = vmatmul.mubr.f32.gmra.mrb[0].mxu0 %v291
  %v435 = vpop.f32.mrb[0].mxu0
  %v436 = vadd.f32 %v362, %v435
  %v437 = vpop.f32.mrb[0].mxu0
  %v438 = vadd.f32 %v366, %v437
  %439 = vdwg.mxu0
  %440 = vst [vmem:[%s7] sm:$0xff] %v436
  %441 = vst [vmem:[%s7 + $0x8] sm:$0xff] %v438
  // Predicated region
  $region30: #{expression_predictor_forward.1} parent=0 // pred_check
    _
  $region31: #{expression_predictor_forward.1} parent=0 // pred_check_branch
    %443 = sbr.rel (0) target = $region33
  $region32: #{expression_predictor_forward.1} parent=0 // pred_region
    _
  $region33: #{expression_predictor_forward.1} parent=0 // pred_fallthru
    _
  // Predicated region
  $region34: #{expression_predictor_forward.1} parent=0 // pred_check
    _
  $region35: #{expression_predictor_forward.1} parent=0 // pred_check_branch
    %445 = sbr.rel (0) target = $region37
  $region36: #{expression_predictor_forward.1} parent=0 // pred_region
    _
  $region37: #{expression_predictor_forward.1} parent=0 // pred_fallthru
    _

</llo_original>
